<compile_context>
chip_gen: v7x
topology: tpu7x:2x2x1
jax: 0.10.0
libtpu: 0.0.40
codegen_flags: <defaults>
</compile_context>

<pallas_src>
import numpy as np
import jax
import jax.numpy as jnp
from jax import lax
from jax.experimental import pallas as pl
from jax.experimental.pallas import tpu as pltpu

REG = 1e-2          # last successful reg in init_L's loops -> self.reg
SIGMA = 1.0
LS = 1.0            # RBF lengthscale (fixed to 1.0; reference uses the same)
DIAG_MIN = 1e-6     # ensure_pos_diag clamp

_NT = (((1,), (1,)), ((), ()))   # dot_general dims: contract last dim of both


def _round_up(n, m):
    return ((n + m - 1) // m) * m


# ------------------------------------------------------------ main tile kernel
def _rcs_tile_kernel(x1_ref, x2_ref, z_ref, zh_ref, b_ref, out_ref,
                     tmp_ref, x1h_ref):
    """out_tile = k(x1_t, x2_t) + [k(x1_t, Z) @ B] @ k(Z, x2_t)   (RBF, ls=1).

    i-only work (x1 norms, k(x1,Z), and its product with B) is computed once per
    row-tile at j == 0 and carried in VMEM scratch across the inner j loop.
    """
    f32 = jnp.float32
    z = z_ref[...].astype(f32)        # (M, D)   resident
    zh = zh_ref[...]                  # (1, M)   resident: 0.5*||z||^2 (hoisted)
    d = z.shape[1]
    ones_r = jnp.ones((1, d), f32)

    # --- i-only work, hoisted to the first j step (scratch persists along j) ---
    @pl.when(pl.program_id(1) == 0)
    def _():
        x1 = x1_ref[...].astype(f32)                                            # (TN1, D)
        x1h = 0.5 * lax.dot_general(x1 * x1, ones_r, _NT,
                                    preferred_element_type=f32)                 # (TN1, 1)
        kx1z = jnp.exp(jnp.minimum(
            lax.dot_general(x1, z, _NT, preferred_element_type=f32)
            - x1h - zh, 0.0))                                                   # (TN1, M)
        tmp_ref[...] = jnp.dot(kx1z, b_ref[...], preferred_element_type=f32)    # (TN1, M)
        x1h_ref[...] = x1h

    x1 = x1_ref[...].astype(f32)      # (TN1, D)
    x1h = x1h_ref[...]                # (TN1, 1)  carried
    x2 = x2_ref[...].astype(f32)      # (TN2, D)

    # Row-norm vectors via the MXU (ones-dot), no cross-lane reductions.
    x2sq = x2 * x2
    x2h_c = 0.5 * lax.dot_general(x2sq, ones_r, _NT, preferred_element_type=f32)   # (TN2,1)
    x2h_r = 0.5 * lax.dot_general(ones_r, x2sq, _NT, preferred_element_type=f32)   # (1,TN2)

    # Factored RBF blocks: exp(min(cross - 0.5||a||^2 - 0.5||b||^2, 0))
    kx2z = jnp.exp(jnp.minimum(
        lax.dot_general(x2, z, _NT, preferred_element_type=f32)
        - x2h_c - zh, 0.0))                                                         # (TN2, M)
    kxx = jnp.exp(jnp.minimum(
        lax.dot_general(x1, x2, _NT, preferred_element_type=f32)
        - x1h - x2h_r, 0.0))                                                        # (TN1, TN2)

    # out = kxx + tmp @ kx2z^T   (single fused correction term)
    out = kxx + lax.dot_general(tmp_ref[...], kx2z, _NT,
                                preferred_element_type=f32)                         # (TN1, TN2)
    out_ref[...] = out.astype(out_ref.dtype)


# ---------------------------------------------------------------- host wrapper
def r_param_cholesky_scaling_forward(x1, Z, L_param, inv_Z, x2=None):
    # TODO(synk): the len(t.shape) == 3 batched-kernel branch (gpytorch batch
    # kernels) is not implemented; only the standard 2D Gram-matrix path is,
    # and the base kernel self.k is fixed to a unit RBF.
    x2_in = x1 if x2 is None else x2
    n1, d = x1.shape
    n2 = x2_in.shape[0]
    m = Z.shape[0]

    # Parameter-only prep in plain jnp (tiny M x M; XLA fuses it, no extra launch).
    lp = jnp.tril(L_param.astype(jnp.float32)) + REG * jnp.eye(m, dtype=jnp.float32)
    dg = jnp.diag(lp)
    L = lp - jnp.diag(dg) + jnp.diag(jnp.maximum(dg, DIAG_MIN))
    B = (jnp.matmul(L, L.T, precision=lax.Precision.HIGHEST)
         - inv_Z.astype(jnp.float32))                                   # (M, M)

    zf = Z.astype(jnp.float32)
    zh = 0.5 * jnp.sum(zf * zf, axis=1)[None, :]                        # (1, M) hoisted Z norms

    # Tile sizes: sublane-aligned rows, lane-dense (multiple of 128) columns.
    tn1 = min(512, _round_up(n1, 8))
    tn2 = min(512, _round_up(n2, 128))
    gi = -(-n1 // tn1)
    gj = -(-n2 // tn2)

    # Pad only the (tiny) input point sets so x-tile reads never go OOB.  The
    # output keeps its true (n1, n2) shape; edge tiles are masked stores, so
    # there is no post-hoc slice / extra HBM pass over the result.
    x1p = jnp.pad(x1.astype(jnp.float32), ((0, gi * tn1 - n1), (0, 0)))
    x2p = jnp.pad(x2_in.astype(jnp.float32), ((0, gj * tn2 - n2), (0, 0)))

    return pl.pallas_call(
        _rcs_tile_kernel,
        out_shape=jax.ShapeDtypeStruct((n1, n2), jnp.float32),
        grid_spec=pltpu.PrefetchScalarGridSpec(
            num_scalar_prefetch=0,
            grid=(gi, gj),
            in_specs=[
                pl.BlockSpec((tn1, d), lambda i, j: (i, 0)),   # x1 tile (by i)
                pl.BlockSpec((tn2, d), lambda i, j: (j, 0)),   # x2 tile (by j)
                pl.BlockSpec((m, d), lambda i, j: (0, 0)),     # Z   (resident)
                pl.BlockSpec((1, m), lambda i, j: (0, 0)),     # zh  (resident)
                pl.BlockSpec((m, m), lambda i, j: (0, 0)),     # B   (resident)
            ],
            out_specs=pl.BlockSpec((tn1, tn2), lambda i, j: (i, j)),
            scratch_shapes=[
                pltpu.VMEM((tn1, m), jnp.float32),             # tmp = k(x1,Z) @ B (i-carry)
                pltpu.VMEM((tn1, 1), jnp.float32),             # 0.5*||x1||^2       (i-carry)
            ],
        ),
        compiler_params=pltpu.CompilerParams(
            # i parallel (megacore / dual-TC sharding); j arbitrary (scratch carry).
            dimension_semantics=("parallel", "arbitrary"),
            vmem_limit_bytes=32 * 1024 * 1024,
        ),
    )(x1p, x2p, zf, zh, B)


# ------------------------------------------------------------------- reference
def _rbf_np(a, b, ls=LS):
    d2 = ((a[:, None, :] - b[None, :, :]) ** 2).sum(-1)
    return np.exp(-0.5 * d2 / (ls * ls))


def _reference_np(x1, Z, L_param, inv_Z, x2=None):
    L = np.tril(L_param) + np.eye(L_param.shape[0]) * REG
    dgn = np.clip(np.diag(L), DIAG_MIN, None)
    L = L - np.diag(np.diag(L)) + np.diag(dgn)
    if x2 is None:
        kzx = _rbf_np(Z, x1)
        t = L.T @ kzx
        sol = inv_Z @ kzx
        return _rbf_np(x1, x1) - kzx.T @ sol + t.T @ t
    kzx1 = _rbf_np(Z, x1)
    kzx2 = _rbf_np(Z, x2)
    t = L.T @ kzx2
    t_ = kzx1.T @ L
    sol = inv_Z @ kzx2
    return _rbf_np(x1, x2) - kzx1.T @ sol + t_ @ t


if __name__ == "__main__":
    def run_case(key, M, N, D, N1, N2):
        kZ, kX, k1, k2 = jax.random.split(key, 4)
        Z = jax.random.normal(kZ, (M, D), jnp.float32)
        X = jax.random.normal(kX, (N, D), jnp.float32)
        x1 = jax.random.normal(k1, (N1, D), jnp.float32)
        x2 = jax.random.normal(k2, (N2, D), jnp.float32)

        # Deterministic parameter init mirroring init_L (float64 numpy glue).
        Z64 = np.asarray(Z, np.float64)
        X64 = np.asarray(X, np.float64)
        kzz = _rbf_np(Z64, Z64)
        kx = _rbf_np(Z64, X64)
        eye = np.eye(M)
        A = kzz + kx @ kx.T / SIGMA + eye * REG
        np.linalg.cholesky(A)                                 # chol_L existence check
        L_param64 = np.linalg.cholesky(np.linalg.inv(A))      # cholesky(cholesky_inverse)
        inv_Z64 = np.linalg.inv(kzz + eye * REG)              # cholesky_inverse(inv_L)
        L_param = jnp.asarray(L_param64, jnp.float32)
        inv_Z = jnp.asarray(inv_Z64, jnp.float32)

        out_self = jax.block_until_ready(
            r_param_cholesky_scaling_forward(x1, Z, L_param, inv_Z))
        out_cross = jax.block_until_ready(
            r_param_cholesky_scaling_forward(x1, Z, L_param, inv_Z, x2=x2))

        x1_64 = np.asarray(x1, np.float64)
        x2_64 = np.asarray(x2, np.float64)
        ref_self = _reference_np(x1_64, Z64, L_param64, inv_Z64)
        ref_cross = _reference_np(x1_64, Z64, L_param64, inv_Z64, x2=x2_64)

        assert out_self.shape == (N1, N1) and out_cross.shape == (N1, N2)
        assert np.allclose(np.asarray(out_self), ref_self, atol=2e-3, rtol=2e-3), \
            float(np.abs(np.asarray(out_self) - ref_self).max())
        assert np.allclose(np.asarray(out_cross), ref_cross, atol=2e-3, rtol=2e-3), \
            float(np.abs(np.asarray(out_cross) - ref_cross).max())

    key = jax.random.PRNGKey(0)
    ka, kb = jax.random.split(key)
    # Small single-tile case (exercises block-shape > array edge masking).
    run_case(ka, M=16, N=32, D=8, N1=16, N2=12)
    # Multi-tile case (exercises the 2-D grid, the j==0 hoist carry, and
    # masked edge tiles on both output axes).
    run_case(kb, M=24, N=48, D=8, N1=600, N2=700)
    print("KERNEL_OK")
</pallas_src>

<mosaic_0001>
module attributes {stable_mosaic.version = 11 : i64} {
  func.func @_rcs_tile_kernel(%arg0: i32, %arg1: i32, %arg2: memref<16x8xf32, #tpu.memory_space<vmem>>, %arg3: memref<128x8xf32, #tpu.memory_space<vmem>>, %arg4: memref<16x8xf32, #tpu.memory_space<vmem>>, %arg5: memref<1x16xf32, #tpu.memory_space<vmem>>, %arg6: memref<16x16xf32, #tpu.memory_space<vmem>>, %arg7: memref<16x128xf32, #tpu.memory_space<vmem>>, %arg8: memref<16x16xf32, #tpu.memory_space<vmem>>, %arg9: memref<16x1xf32, #tpu.memory_space<vmem>>) attributes {dimension_semantics = [#tpu.dimension_semantics<parallel>, #tpu.dimension_semantics<arbitrary>], iteration_bounds = array<i64: 1, 1>, scalar_prefetch = 0 : i64, scratch_operands = 2 : i64, tpu.core_type = #tpu.core_type<tc>, window_params = [{transform_indices = @transform_0, window_bounds = array<i64: 16, 8>}, {transform_indices = @transform_1, window_bounds = array<i64: 128, 8>}, {pipeline_mode = #tpu.pipeline_mode<synchronous>, transform_indices = @transform_2, window_bounds = array<i64: 16, 8>}, {pipeline_mode = #tpu.pipeline_mode<synchronous>, transform_indices = @transform_3, window_bounds = array<i64: 1, 16>}, {pipeline_mode = #tpu.pipeline_mode<synchronous>, transform_indices = @transform_4, window_bounds = array<i64: 16, 16>}, {transform_indices = @transform_5, window_bounds = array<i64: 16, 128>}]} {
    %c0 = arith.constant 0 : index
    %c0_0 = arith.constant 0 : index
    %0 = vector.load %arg4[%c0, %c0_0] : memref<16x8xf32, #tpu.memory_space<vmem>>, vector<16x8xf32>
    %c0_1 = arith.constant 0 : index
    %c0_2 = arith.constant 0 : index
    %1 = vector.load %arg5[%c0_1, %c0_2] : memref<1x16xf32, #tpu.memory_space<vmem>>, vector<1x16xf32>
    %cst = arith.constant 1.000000e+00 : f32
    %2 = vector.broadcast %cst : f32 to vector<1x8xf32>
    %c0_i32 = arith.constant 0 : i32
    %3 = arith.cmpi eq, %arg1, %c0_i32 : i32
    %4 = arith.extui %3 : i1 to i32
    %c0_i32_3 = arith.constant 0 : i32
    %5 = arith.cmpi ne, %4, %c0_i32_3 : i32
    scf.if %5 {
      %c0_23 = arith.constant 0 : index
      %c0_24 = arith.constant 0 : index
      %36 = vector.load %arg2[%c0_23, %c0_24] : memref<16x8xf32, #tpu.memory_space<vmem>>, vector<16x8xf32>
      %37 = arith.mulf %36, %36 : vector<16x8xf32>
      %cst_25 = arith.constant dense<0.000000e+00> : vector<16x1xf32>
      %38 = tpu.matmul %37, %2, %cst_25 {dimension_numbers = #tpu.dot_dimension_numbers<[1], [1], [0], [0], [0, 0, 1, 0], [], []>} : vector<16x8xf32>, vector<1x8xf32>, vector<16x1xf32> -> vector<16x1xf32>
      %cst_26 = arith.constant 5.000000e-01 : f32
      %39 = vector.broadcast %cst_26 : f32 to vector<16x1xf32>
      %40 = arith.mulf %39, %38 : vector<16x1xf32>
      %cst_27 = arith.constant dense<0.000000e+00> : vector<16x16xf32>
      %41 = tpu.matmul %36, %0, %cst_27 {dimension_numbers = #tpu.dot_dimension_numbers<[1], [1], [0], [0], [0, 0, 1, 0], [], []>} : vector<16x8xf32>, vector<16x8xf32>, vector<16x16xf32> -> vector<16x16xf32>
      %42 = vector.broadcast %40 : vector<16x1xf32> to vector<16x16xf32>
      %43 = arith.subf %41, %42 : vector<16x16xf32>
      %44 = vector.broadcast %1 : vector<1x16xf32> to vector<16x16xf32>
      %45 = arith.subf %43, %44 : vector<16x16xf32>
      %cst_28 = arith.constant 0.000000e+00 : f32
      %46 = vector.broadcast %cst_28 : f32 to vector<16x16xf32>
      %47 = arith.minimumf %45, %46 : vector<16x16xf32>
      %48 = math.exp %47 : vector<16x16xf32>
      %c0_29 = arith.constant 0 : index
      %c0_30 = arith.constant 0 : index
      %49 = vector.load %arg6[%c0_29, %c0_30] : memref<16x16xf32, #tpu.memory_space<vmem>>, vector<16x16xf32>
      %cst_31 = arith.constant dense<0.000000e+00> : vector<16x16xf32>
      %50 = tpu.matmul %48, %49, %cst_31 {dimension_numbers = #tpu.dot_dimension_numbers<[1], [0], [0], [1], [0, 0, 1, 1], [], []>} : vector<16x16xf32>, vector<16x16xf32>, vector<16x16xf32> -> vector<16x16xf32>
      %c0_32 = arith.constant 0 : index
      %c0_33 = arith.constant 0 : index
      %51 = vector.load %arg8[%c0_32, %c0_33] : memref<16x16xf32, #tpu.memory_space<vmem>>, vector<16x16xf32>
      tpu.vector_store %arg8[%c0_32, %c0_33], %50 {strides = array<i32>} : memref<16x16xf32, #tpu.memory_space<vmem>>, vector<16x16xf32>,
      %c0_34 = arith.constant 0 : index
      %c0_35 = arith.constant 0 : index
      %52 = vector.load %arg9[%c0_34, %c0_35] : memref<16x1xf32, #tpu.memory_space<vmem>>, vector<16x1xf32>
      tpu.vector_store %arg9[%c0_34, %c0_35], %40 {strides = array<i32>} : memref<16x1xf32, #tpu.memory_space<vmem>>, vector<16x1xf32>,
    } else {
    }
    %c0_4 = arith.constant 0 : index
    %c0_5 = arith.constant 0 : index
    %6 = vector.load %arg2[%c0_4, %c0_5] : memref<16x8xf32, #tpu.memory_space<vmem>>, vector<16x8xf32>
    %c0_6 = arith.constant 0 : index
    %c0_7 = arith.constant 0 : index
    %7 = vector.load %arg9[%c0_6, %c0_7] : memref<16x1xf32, #tpu.memory_space<vmem>>, vector<16x1xf32>
    %c0_8 = arith.constant 0 : index
    %c0_9 = arith.constant 0 : index
    %8 = vector.load %arg3[%c0_8, %c0_9] : memref<128x8xf32, #tpu.memory_space<vmem>>, vector<128x8xf32>
    %9 = arith.mulf %8, %8 : vector<128x8xf32>
    %cst_10 = arith.constant dense<0.000000e+00> : vector<128x1xf32>
    %10 = tpu.matmul %9, %2, %cst_10 {dimension_numbers = #tpu.dot_dimension_numbers<[1], [1], [0], [0], [0, 0, 1, 0], [], []>} : vector<128x8xf32>, vector<1x8xf32>, vector<128x1xf32> -> vector<128x1xf32>
    %cst_11 = arith.constant 5.000000e-01 : f32
    %11 = vector.broadcast %cst_11 : f32 to vector<128x1xf32>
    %12 = arith.mulf %11, %10 : vector<128x1xf32>
    %cst_12 = arith.constant dense<0.000000e+00> : vector<1x128xf32>
    %13 = tpu.matmul %2, %9, %cst_12 {dimension_numbers = #tpu.dot_dimension_numbers<[1], [1], [0], [0], [0, 0, 1, 0], [], []>} : vector<1x8xf32>, vector<128x8xf32>, vector<1x128xf32> -> vector<1x128xf32>
    %cst_13 = arith.constant 5.000000e-01 : f32
    %14 = vector.broadcast %cst_13 : f32 to vector<1x128xf32>
    %15 = arith.mulf %14, %13 : vector<1x128xf32>
    %cst_14 = arith.constant dense<0.000000e+00> : vector<128x16xf32>
    %16 = tpu.matmul %8, %0, %cst_14 {dimension_numbers = #tpu.dot_dimension_numbers<[1], [1], [0], [0], [0, 0, 1, 0], [], []>} : vector<128x8xf32>, vector<16x8xf32>, vector<128x16xf32> -> vector<128x16xf32>
    %17 = vector.broadcast %12 : vector<128x1xf32> to vector<128x16xf32>
    %18 = arith.subf %16, %17 : vector<128x16xf32>
    %19 = vector.broadcast %1 : vector<1x16xf32> to vector<128x16xf32>
    %20 = arith.subf %18, %19 : vector<128x16xf32>
    %cst_15 = arith.constant 0.000000e+00 : f32
    %21 = vector.broadcast %cst_15 : f32 to vector<128x16xf32>
    %22 = arith.minimumf %20, %21 : vector<128x16xf32>
    %23 = math.exp %22 : vector<128x16xf32>
    %cst_16 = arith.constant dense<0.000000e+00> : vector<16x128xf32>
    %24 = tpu.matmul %6, %8, %cst_16 {dimension_numbers = #tpu.dot_dimension_numbers<[1], [1], [0], [0], [0, 0, 1, 0], [], []>} : vector<16x8xf32>, vector<128x8xf32>, vector<16x128xf32> -> vector<16x128xf32>
    %25 = vector.broadcast %7 : vector<16x1xf32> to vector<16x128xf32>
    %26 = arith.subf %24, %25 : vector<16x128xf32>
    %27 = vector.broadcast %15 : vector<1x128xf32> to vector<16x128xf32>
    %28 = arith.subf %26, %27 : vector<16x128xf32>
    %cst_17 = arith.constant 0.000000e+00 : f32
    %29 = vector.broadcast %cst_17 : f32 to vector<16x128xf32>
    %30 = arith.minimumf %28, %29 : vector<16x128xf32>
    %31 = math.exp %30 : vector<16x128xf32>
    %c0_18 = arith.constant 0 : index
    %c0_19 = arith.constant 0 : index
    %32 = vector.load %arg8[%c0_18, %c0_19] : memref<16x16xf32, #tpu.memory_space<vmem>>, vector<16x16xf32>
    %cst_20 = arith.constant dense<0.000000e+00> : vector<16x128xf32>
    %33 = tpu.matmul %32, %23, %cst_20 {dimension_numbers = #tpu.dot_dimension_numbers<[1], [1], [0], [0], [0, 0, 1, 0], [], []>} : vector<16x16xf32>, vector<128x16xf32>, vector<16x128xf32> -> vector<16x128xf32>
    %34 = arith.addf %31, %33 : vector<16x128xf32>
    %c0_21 = arith.constant 0 : index
    %c0_22 = arith.constant 0 : index
    %35 = vector.load %arg7[%c0_21, %c0_22] : memref<16x128xf32, #tpu.memory_space<vmem>>, vector<16x128xf32>
    tpu.vector_store %arg7[%c0_21, %c0_22], %34 {strides = array<i32>} : memref<16x128xf32, #tpu.memory_space<vmem>>, vector<16x128xf32>,
    return
  }
  func.func @transform_0(%arg0: i32, %arg1: i32) -> (i32, i32) {
    %c0_i32 = arith.constant 0 : i32
    %c0_i32_0 = arith.constant 0 : i32
    return %arg0, %c0_i32 : i32, i32
  }
  func.func @transform_1(%arg0: i32, %arg1: i32) -> (i32, i32) {
    %c0_i32 = arith.constant 0 : i32
    %c0_i32_0 = arith.constant 0 : i32
    return %arg1, %c0_i32 : i32, i32
  }
  func.func @transform_2(%arg0: i32, %arg1: i32) -> (i32, i32) {
    %c0_i32 = arith.constant 0 : i32
    %c0_i32_0 = arith.constant 0 : i32
    %c0_i32_1 = arith.constant 0 : i32
    return %c0_i32, %c0_i32_0 : i32, i32
  }
  func.func @transform_3(%arg0: i32, %arg1: i32) -> (i32, i32) {
    %c0_i32 = arith.constant 0 : i32
    %c0_i32_0 = arith.constant 0 : i32
    %c0_i32_1 = arith.constant 0 : i32
    return %c0_i32, %c0_i32_0 : i32, i32
  }
  func.func @transform_4(%arg0: i32, %arg1: i32) -> (i32, i32) {
    %c0_i32 = arith.constant 0 : i32
    %c0_i32_0 = arith.constant 0 : i32
    %c0_i32_1 = arith.constant 0 : i32
    return %c0_i32, %c0_i32_0 : i32, i32
  }
  func.func @transform_5(%arg0: i32, %arg1: i32) -> (i32, i32) {
    %c0_i32 = arith.constant 0 : i32
    return %arg0, %arg1 : i32, i32
  }
}

</mosaic_0001>

<llo_original>
// kernel: tpu_custom_call.1
$region0: #{tpu_custom_call.1}
  #allocation0 [shape = 'u32[]', space=smem, size = 0x4, offset = 0x4, fixed_abs, tag = 'smem constant byte address 0x4 - core index']
  #allocation1 [shape = 'u32[144,128]{1,0:T(1,128)}', space=vmem, size = 0x12000, scoped, tag = 'internal scratch']
  #allocation2 [shape = 'f32[16,16]{1,0:T(8,128)}', space=vmem, size = 0x2000, scoped, tag = 'scratch operand']
  #allocation3 [shape = 'f32[16,1]{1,0:T(8,128)}', space=vmem, size = 0x2000, scoped, tag = 'scratch operand']
  %s0 = inlined_call_operand.vmem [shape: f32[16,8], index: 0, kind: input, shape index: {}]
  %s1 = inlined_call_operand.vmem [shape: f32[128,8], index: 1, kind: input, shape index: {}]
  %s2 = inlined_call_operand.vmem [shape: f32[16,8], index: 2, kind: input, shape index: {}]
  %s3 = inlined_call_operand.vmem [shape: f32[1,16], index: 3, kind: input, shape index: {}]
  %s4 = inlined_call_operand.vmem [shape: f32[16,16], index: 4, kind: input, shape index: {}]
  %s5 = inlined_call_operand.hbm [shape: f32[16,16], index: 5, kind: output, shape index: {}]
  %s6 = sld [smem:[#allocation0]]
  $region34: #{tpu_custom_call.1} parent=0
    _
  %s8 = ssub.s32 1, %s6
  %s9 = scalar_select 0, %s8, %s6
  $region1: #{tpu_custom_call.1} parent=0
    #allocation4 [shape = 'u8[8192]{0}', space=vmem, size = 0x2000, scoped, tag = 'output window, operand 0, single buffered']
    #allocation5 [shape = 's32[1]{0}', space=sflag, size = 0x4, scoped, tag = 'scoped memory for tpu_custom_call.1']
    %10 = vsyncpa [#allocation5], 0
    // Predicated region
    $region2: #{tpu_custom_call.1} parent=1 // pred_check
      _
    $region3: #{tpu_custom_call.1} parent=1 // pred_check_branch
      %12 = sbr.rel (0) target = $region5
    $region4: #{tpu_custom_call.1} parent=1 // pred_region
      _
    $region5: #{tpu_custom_call.1} parent=1 // pred_fallthru
      _
    // Predicated region
    $region6: #{tpu_custom_call.1} parent=1 // pred_check
      _
    $region7: #{tpu_custom_call.1} parent=1 // pred_check_branch
      %14 = sbr.rel (0) target = $region9
    $region8: #{tpu_custom_call.1} parent=1 // pred_region
      _
    $region9: #{tpu_custom_call.1} parent=1 // pred_fallthru
      _
    // Predicated region
    $region10: #{tpu_custom_call.1} parent=1 // pred_check
      _
    $region11: #{tpu_custom_call.1} parent=1 // pred_check_branch
      %16 = sbr.rel (0) target = $region13
    $region12: #{tpu_custom_call.1} parent=1 // pred_region
      _
    $region13: #{tpu_custom_call.1} parent=1 // pred_fallthru
      _
    // Predicated region
    $region14: #{tpu_custom_call.1} parent=1 // pred_check
      _
    $region15: #{tpu_custom_call.1} parent=1 // pred_check_branch
      %18 = sbr.rel (0) target = $region17
    $region16: #{tpu_custom_call.1} parent=1 // pred_region
      _
    $region17: #{tpu_custom_call.1} parent=1 // pred_fallthru
      _
    // Predicated region
    $region18: #{tpu_custom_call.1} parent=1 // pred_check
      _
    $region19: #{tpu_custom_call.1} parent=1 // pred_check_branch
      %20 = sbr.rel (0) target = $region21
    $region20: #{tpu_custom_call.1} parent=1 // pred_region
      _
    $region21: #{tpu_custom_call.1} parent=1 // pred_fallthru
      _
    %v21 = vld [vmem:[%s2] sm:$0xff]
    %v22 = vld [vmem:[%s2 + $0x8] sm:$0xff]
    %v23 = vld [vmem:[%s3] sm:$0x1]
    %p24 = scmp.eq.s32.totalorder 0, 0
    // Predicated region
    $region22: #{tpu_custom_call.1} parent=1 // pred_check
      %p25 = pneg %p24
    $region23: #{tpu_custom_call.1} parent=1 // pred_check_branch
      %27 = sbr.rel (%p25) target = $region25
    $region24: #{tpu_custom_call.1} parent=1 // pred_region
      %v28 = vld [vmem:[%s0] sm:$0xff]
      %v29 = vld [vmem:[%s0 + $0x8] sm:$0xff]
      %v30 = vmul.f32 %v28, %v28
      %v31 = vmul.f32 %v29, %v29
      %vm32 = vcmask 64512
      %v33 = vsel %vm32, %v30, 0.0
      %34 = vadd.xlane.f32.xlu0 %v33
      %v35 = vpop.xlane.xlu0 %34
      %v36 = vsel %vm32, %v31, 0.0
      %37 = vadd.xlane.f32.xlu0 %v36
      %v38 = vpop.xlane.xlu0 %37
      %v39 = vmul.f32 %v35, 0.5
      %v40 = vmul.f32 %v38, 0.5
      %v42 = vsel %vm32, %v28, 0
      %v45 = vsel %vm32, %v29, 0
      %v48 = vsel %vm32, %v21, 0
      %v51 = vsel %vm32, %v22, 0
      %53 = vmatprep.subr.mxu0 0.0
      %54 = vmatpush1.xpose.msra.mxu0 %v48
      %55 = vmatprep.subr.mxu0 0.0
      %56 = vmatpush1.xpose.msra.mxu0 %v51
      %57 = vmatprep.subr.mxu0 0.0
      %58 = vmatpush1.xpose.msra.mxu0 0.0
      %59 = vmatprep.subr.mxu0 0.0
      %60 = vmatpush1.xpose.msra.mxu0 0.0
      %61 = vmatprep.subr.mxu0 0.0
      %62 = vmatpush1.xpose.msra.mxu0 0.0
      %63 = vmatprep.subr.mxu0 0.0
      %64 = vmatpush1.xpose.msra.mxu0 0.0
      %65 = vmatprep.subr.mxu0 0.0
      %66 = vmatpush1.xpose.msra.mxu0 0.0
      %67 = vmatprep.subr.mxu0 0.0
      %68 = vmatpush1.xpose.msra.mxu0 0.0
      %69 = vmatprep.subr.mxu0 0.0
      %70 = vmatpush1.xpose.msra.mxu0 0.0
      %71 = vmatprep.subr.mxu0 0.0
      %72 = vmatpush1.xpose.msra.mxu0 0.0
      %73 = vmatprep.subr.mxu0 0.0
      %74 = vmatpush1.xpose.msra.mxu0 0.0
      %75 = vmatprep.subr.mxu0 0.0
      %76 = vmatpush1.xpose.msra.mxu0 0.0
      %77 = vmatprep.subr.mxu0 0.0
      %78 = vmatpush1.xpose.msra.mxu0 0.0
      %79 = vmatprep.subr.mxu0 0.0
      %80 = vmatpush1.xpose.msra.mxu0 0.0
      %81 = vmatprep.subr.mxu0 0.0
      %82 = vmatpush1.xpose.msra.mxu0 0.0
      %83 = vmatprep.subr.mxu0 0.0
      %84 = vmatpush1.xpose.msra.mxu0 0.0
      %85 = vmatprep.subr.mxu0 0.0
      %86 = vmatpush1.xpose.msra.mxu0 0.0
      %87 = vmatprep.subr.mxu0 0.0
      %88 = vmatpush1.xpose.msra.mxu0 0.0
      %89 = vmatprep.subr.mxu0 0.0
      %90 = vmatpush1.xpose.msra.mxu0 0.0
      %91 = vmatprep.subr.mxu0 0.0
      %92 = vmatpush1.xpose.msra.mxu0 0.0
      %93 = vmatprep.subr.mxu0 0.0
      %94 = vmatpush1.xpose.msra.mxu0 0.0
      %95 = vmatprep.subr.mxu0 0.0
      %96 = vmatpush1.xpose.msra.mxu0 0.0
      %97 = vmatprep.subr.mxu0 0.0
      %98 = vmatpush1.xpose.msra.mxu0 0.0
      %99 = vmatprep.subr.mxu0 0.0
      %100 = vmatpush1.xpose.msra.mxu0 0.0
      %101 = vmatprep.subr.mxu0 0.0
      %102 = vmatpush1.xpose.msra.mxu0 0.0
      %103 = vmatprep.subr.mxu0 0.0
      %104 = vmatpush1.xpose.msra.mxu0 0.0
      %105 = vmatprep.subr.mxu0 0.0
      %106 = vmatpush1.xpose.msra.mxu0 0.0
      %107 = vmatprep.subr.mxu0 0.0
      %108 = vmatpush1.xpose.msra.mxu0 0.0
      %109 = vmatprep.subr.mxu0 0.0
      %110 = vmatpush1.xpose.msra.mxu0 0.0
      %111 = vmatprep.subr.mxu0 0.0
      %112 = vmatpush1.xpose.msra.mxu0 0.0
      %113 = vmatprep.subr.mxu0 0.0
      %114 = vmatpush1.xpose.msra.mxu0 0.0
      %115 = vmatprep.subr.mxu0 0.0
      %116 = vmatpush1.xpose.msra.mxu0 0.0
      %117 = vmatprep.mubr.f32.mxu0 0.0
      %118 = vmatmul.mubr.f32.gmra.mrb[0].mxu0 %v42
      %v119 = vpop.f32.mrb[0].mxu0
      %v120 = vadd.f32 0.0, %v119
      %v121 = vpop.f32.mrb[0].mxu0
      %122 = vmatprep.mubr.f32.mxu0 0.0
      %123 = vmatmul.mubr.f32.gmra.mrb[0].mxu0 %v45
      %v124 = vpop.f32.mrb[0].mxu0
      %v125 = vadd.f32 0.0, %v124
      %v126 = vpop.f32.mrb[0].mxu0
      %127 = vdwg.mxu0
      %v128 = vsub.f32 %v120, %v39
      %v129 = vsub.f32 %v125, %v40
      %v131 = vlaneseq
      %v132 = vshrl.u32 %v131, 7
      %v133 = vsub.s32 0, %v132
      %v134 = vrot.slane %v23, %v133
      %v136 = vsub.f32 %v128, %v134
      %v137 = vsub.f32 %v129, %v134
      %v138 = vmin.f32 %v136, 0.0
      %v139 = vmin.f32 %v137, 0.0
      %v140 = vmul.f32 %v138, 1.442695
      %v141 = vpow.pop %v140
      %v142 = vmul.f32 %v139, 1.442695
      %v143 = vpow.pop %v142
      %v144 = vld [vmem:[%s4] sm:$0xff]
      %v145 = vld [vmem:[%s4 + $0x8] sm:$0xff]
      %vm146 = vcmask 130048
      %v148 = vsel %vm146, %v141, 0
      %v151 = vsel %vm146, %v143, 0
      %153 = vmatprep.subr.mxu0 0.0
      %154 = vmatpush1.msra.mxu0 %v144
      %155 = vmatprep.subr.mxu0 0.0
      %156 = vmatpush1.msra.mxu0 %v145
      %157 = vmatprep.subr.mxu0 0.0
      %158 = vmatpush1.msra.mxu0 0.0
      %159 = vmatprep.subr.mxu0 0.0
      %160 = vmatpush1.msra.mxu0 0.0
      %161 = vmatprep.subr.mxu0 0.0
      %162 = vmatpush1.msra.mxu0 0.0
      %163 = vmatprep.subr.mxu0 0.0
      %164 = vmatpush1.msra.mxu0 0.0
      %165 = vmatprep.subr.mxu0 0.0
      %166 = vmatpush1.msra.mxu0 0.0
      %167 = vmatprep.subr.mxu0 0.0
      %168 = vmatpush1.msra.mxu0 0.0
      %169 = vmatprep.subr.mxu0 0.0
      %170 = vmatpush1.msra.mxu0 0.0
      %171 = vmatprep.subr.mxu0 0.0
      %172 = vmatpush1.msra.mxu0 0.0
      %173 = vmatprep.subr.mxu0 0.0
      %174 = vmatpush1.msra.mxu0 0.0
      %175 = vmatprep.subr.mxu0 0.0
      %176 = vmatpush1.msra.mxu0 0.0
      %177 = vmatprep.subr.mxu0 0.0
      %178 = vmatpush1.msra.mxu0 0.0
      %179 = vmatprep.subr.mxu0 0.0
      %180 = vmatpush1.msra.mxu0 0.0
      %181 = vmatprep.subr.mxu0 0.0
      %182 = vmatpush1.msra.mxu0 0.0
      %183 = vmatprep.subr.mxu0 0.0
      %184 = vmatpush1.msra.mxu0 0.0
      %185 = vmatprep.subr.mxu0 0.0
      %186 = vmatpush1.msra.mxu0 0.0
      %187 = vmatprep.subr.mxu0 0.0
      %188 = vmatpush1.msra.mxu0 0.0
      %189 = vmatprep.subr.mxu0 0.0
      %190 = vmatpush1.msra.mxu0 0.0
      %191 = vmatprep.subr.mxu0 0.0
      %192 = vmatpush1.msra.mxu0 0.0
      %193 = vmatprep.subr.mxu0 0.0
      %194 = vmatpush1.msra.mxu0 0.0
      %195 = vmatprep.subr.mxu0 0.0
      %196 = vmatpush1.msra.mxu0 0.0
      %197 = vmatprep.subr.mxu0 0.0
      %198 = vmatpush1.msra.mxu0 0.0
      %199 = vmatprep.subr.mxu0 0.0
      %200 = vmatpush1.msra.mxu0 0.0
      %201 = vmatprep.subr.mxu0 0.0
      %202 = vmatpush1.msra.mxu0 0.0
      %203 = vmatprep.subr.mxu0 0.0
      %204 = vmatpush1.msra.mxu0 0.0
      %205 = vmatprep.subr.mxu0 0.0
      %206 = vmatpush1.msra.mxu0 0.0
      %207 = vmatprep.subr.mxu0 0.0
      %208 = vmatpush1.msra.mxu0 0.0
      %209 = vmatprep.subr.mxu0 0.0
      %210 = vmatpush1.msra.mxu0 0.0
      %211 = vmatprep.subr.mxu0 0.0
      %212 = vmatpush1.msra.mxu0 0.0
      %213 = vmatprep.subr.mxu0 0.0
      %214 = vmatpush1.msra.mxu0 0.0
      %215 = vmatprep.subr.mxu0 0.0
      %216 = vmatpush1.msra.mxu0 0.0
      %217 = vmatprep.mubr.f32.mxu0 0.0
      %218 = vmatmul.mubr.f32.gmra.mrb[0].mxu0 %v148
      %v219 = vpop.f32.mrb[0].mxu0
      %v220 = vadd.f32 0.0, %v219
      %v221 = vpop.f32.mrb[0].mxu0
      %222 = vmatprep.mubr.f32.mxu0 0.0
      %223 = vmatmul.mubr.f32.gmra.mrb[0].mxu0 %v151
      %v224 = vpop.f32.mrb[0].mxu0
      %v225 = vadd.f32 0.0, %v224
      %v226 = vpop.f32.mrb[0].mxu0
      %227 = vdwg.mxu0
      %228 = vst.msk [vmem:[#allocation2] sm:$0xff] %vm146, %v220
      %229 = vst.msk [vmem:[#allocation2 + $0x8] sm:$0xff] %vm146, %v225
      %vm230 = vcmask 7168
      %231 = vst.msk [vmem:[#allocation3] sm:$0xff] %vm230, %v39
      %232 = vst.msk [vmem:[#allocation3 + $0x8] sm:$0xff] %vm230, %v40
    $region25: #{tpu_custom_call.1} parent=1 // pred_fallthru
      _
    %v233 = vld [vmem:[%s0] sm:$0xff]
    %v234 = vld [vmem:[%s0 + $0x8] sm:$0xff]
    %v235 = vld [vmem:[#allocation3] sm:$0xff]
    %v236 = vld [vmem:[#allocation3 + $0x8] sm:$0xff]
    %v237 = vld [vmem:[%s1] sm:$0xff]
    %v238 = vld [vmem:[%s1 + $0x8] sm:$0xff]
    %v239 = vld [vmem:[%s1 + $0x10] sm:$0xff]
    %v240 = vld [vmem:[%s1 + $0x18] sm:$0xff]
    %v241 = vld [vmem:[%s1 + $0x20] sm:$0xff]
    %v242 = vld [vmem:[%s1 + $0x28] sm:$0xff]
    %v243 = vld [vmem:[%s1 + $0x30] sm:$0xff]
    %v244 = vld [vmem:[%s1 + $0x38] sm:$0xff]
    %v245 = vld [vmem:[%s1 + $0x40] sm:$0xff]
    %v246 = vld [vmem:[%s1 + $0x48] sm:$0xff]
    %v247 = vld [vmem:[%s1 + $0x50] sm:$0xff]
    %v248 = vld [vmem:[%s1 + $0x58] sm:$0xff]
    %v249 = vld [vmem:[%s1 + $0x60] sm:$0xff]
    %v250 = vld [vmem:[%s1 + $0x68] sm:$0xff]
    %v251 = vld [vmem:[%s1 + $0x70] sm:$0xff]
    %v252 = vld [vmem:[%s1 + $0x78] sm:$0xff]
    %v253 = vmul.f32 %v237, %v237
    %v254 = vmul.f32 %v238, %v238
    %v255 = vmul.f32 %v239, %v239
    %v256 = vmul.f32 %v240, %v240
    %v257 = vmul.f32 %v241, %v241
    %v258 = vmul.f32 %v242, %v242
    %v259 = vmul.f32 %v243, %v243
    %v260 = vmul.f32 %v244, %v244
    %v261 = vmul.f32 %v245, %v245
    %v262 = vmul.f32 %v246, %v246
    %v263 = vmul.f32 %v247, %v247
    %v264 = vmul.f32 %v248, %v248
    %v265 = vmul.f32 %v249, %v249
    %v266 = vmul.f32 %v250, %v250
    %v267 = vmul.f32 %v251, %v251
    %v268 = vmul.f32 %v252, %v252
    %vm269 = vcmask 64512
    %v270 = vsel %vm269, %v253, 0.0
    %271 = vadd.xlane.f32.xlu0 %v270
    %v272 = vpop.xlane.xlu0 %271
    %v273 = vsel %vm269, %v254, 0.0
    %274 = vadd.xlane.f32.xlu0 %v273
    %v275 = vpop.xlane.xlu0 %274
    %v276 = vsel %vm269, %v255, 0.0
    %277 = vadd.xlane.f32.xlu0 %v276
    %v278 = vpop.xlane.xlu0 %277
    %v279 = vsel %vm269, %v256, 0.0
    %280 = vadd.xlane.f32.xlu0 %v279
    %v281 = vpop.xlane.xlu0 %280
    %v282 = vsel %vm269, %v257, 0.0
    %283 = vadd.xlane.f32.xlu0 %v282
    %v284 = vpop.xlane.xlu0 %283
    %v285 = vsel %vm269, %v258, 0.0
    %286 = vadd.xlane.f32.xlu0 %v285
    %v287 = vpop.xlane.xlu0 %286
    %v288 = vsel %vm269, %v259, 0.0
    %289 = vadd.xlane.f32.xlu0 %v288
    %v290 = vpop.xlane.xlu0 %289
    %v291 = vsel %vm269, %v260, 0.0
    %292 = vadd.xlane.f32.xlu0 %v291
    %v293 = vpop.xlane.xlu0 %292
    %v294 = vsel %vm269, %v261, 0.0
    %295 = vadd.xlane.f32.xlu0 %v294
    %v296 = vpop.xlane.xlu0 %295
    %v297 = vsel %vm269, %v262, 0.0
    %298 = vadd.xlane.f32.xlu0 %v297
    %v299 = vpop.xlane.xlu0 %298
    %v300 = vsel %vm269, %v263, 0.0
    %301 = vadd.xlane.f32.xlu0 %v300
    %v302 = vpop.xlane.xlu0 %301
    %v303 = vsel %vm269, %v264, 0.0
    %304 = vadd.xlane.f32.xlu0 %v303
    %v305 = vpop.xlane.xlu0 %304
    %v306 = vsel %vm269, %v265, 0.0
    %307 = vadd.xlane.f32.xlu0 %v306
    %v308 = vpop.xlane.xlu0 %307
    %v309 = vsel %vm269, %v266, 0.0
    %310 = vadd.xlane.f32.xlu0 %v309
    %v311 = vpop.xlane.xlu0 %310
    %v312 = vsel %vm269, %v267, 0.0
    %313 = vadd.xlane.f32.xlu0 %v312
    %v314 = vpop.xlane.xlu0 %313
    %v315 = vsel %vm269, %v268, 0.0
    %316 = vadd.xlane.f32.xlu0 %v315
    %v317 = vpop.xlane.xlu0 %316
    %v318 = vmul.f32 %v272, 0.5
    %v319 = vmul.f32 %v275, 0.5
    %v320 = vmul.f32 %v278, 0.5
    %v321 = vmul.f32 %v281, 0.5
    %v322 = vmul.f32 %v284, 0.5
    %v323 = vmul.f32 %v287, 0.5
    %v324 = vmul.f32 %v290, 0.5
    %v325 = vmul.f32 %v293, 0.5
    %v326 = vmul.f32 %v296, 0.5
    %v327 = vmul.f32 %v299, 0.5
    %v328 = vmul.f32 %v302, 0.5
    %v329 = vmul.f32 %v305, 0.5
    %v330 = vmul.f32 %v308, 0.5
    %v331 = vmul.f32 %v311, 0.5
    %v332 = vmul.f32 %v314, 0.5
    %v333 = vmul.f32 %v317, 0.5
    %v335 = vsel %vm269, 1.0, 0
    %v338 = vsel %vm269, %v253, 0
    %v341 = vsel %vm269, %v254, 0
    %v344 = vsel %vm269, %v255, 0
    %v347 = vsel %vm269, %v256, 0
    %v350 = vsel %vm269, %v257, 0
    %v353 = vsel %vm269, %v258, 0
    %v356 = vsel %vm269, %v259, 0
    %v359 = vsel %vm269, %v260, 0
    %v362 = vsel %vm269, %v261, 0
    %v365 = vsel %vm269, %v262, 0
    %v368 = vsel %vm269, %v263, 0
    %v371 = vsel %vm269, %v264, 0
    %v374 = vsel %vm269, %v265, 0
    %v377 = vsel %vm269, %v266, 0
    %v380 = vsel %vm269, %v267, 0
    %v383 = vsel %vm269, %v268, 0
    %385 = vmatprep.subr.mxu0 0.0
    %386 = vmatpush1.xpose.msra.mxu0 %v338
    %387 = vmatprep.subr.mxu0 0.0
    %388 = vmatpush1.xpose.msra.mxu0 %v341
    %389 = vmatprep.subr.mxu0 0.0
    %390 = vmatpush1.xpose.msra.mxu0 %v344
    %391 = vmatprep.subr.mxu0 0.0
    %392 = vmatpush1.xpose.msra.mxu0 %v347
    %393 = vmatprep.subr.mxu0 0.0
    %394 = vmatpush1.xpose.msra.mxu0 %v350
    %395 = vmatprep.subr.mxu0 0.0
    %396 = vmatpush1.xpose.msra.mxu0 %v353
    %397 = vmatprep.subr.mxu0 0.0
    %398 = vmatpush1.xpose.msra.mxu0 %v356
    %399 = vmatprep.subr.mxu0 0.0
    %400 = vmatpush1.xpose.msra.mxu0 %v359
    %401 = vmatprep.subr.mxu0 0.0
    %402 = vmatpush1.xpose.msra.mxu0 %v362
    %403 = vmatprep.subr.mxu0 0.0
    %404 = vmatpush1.xpose.msra.mxu0 %v365
    %405 = vmatprep.subr.mxu0 0.0
    %406 = vmatpush1.xpose.msra.mxu0 %v368
    %407 = vmatprep.subr.mxu0 0.0
    %408 = vmatpush1.xpose.msra.mxu0 %v371
    %409 = vmatprep.subr.mxu0 0.0
    %410 = vmatpush1.xpose.msra.mxu0 %v374
    %411 = vmatprep.subr.mxu0 0.0
    %412 = vmatpush1.xpose.msra.mxu0 %v377
    %413 = vmatprep.subr.mxu0 0.0
    %414 = vmatpush1.xpose.msra.mxu0 %v380
    %415 = vmatprep.subr.mxu0 0.0
    %416 = vmatpush1.xpose.msra.mxu0 %v383
    %417 = vmatprep.subr.mxu0 0.0
    %418 = vmatpush1.xpose.msra.mxu0 0.0
    %419 = vmatprep.subr.mxu0 0.0
    %420 = vmatpush1.xpose.msra.mxu0 0.0
    %421 = vmatprep.subr.mxu0 0.0
    %422 = vmatpush1.xpose.msra.mxu0 0.0
    %423 = vmatprep.subr.mxu0 0.0
    %424 = vmatpush1.xpose.msra.mxu0 0.0
    %425 = vmatprep.subr.mxu0 0.0
    %426 = vmatpush1.xpose.msra.mxu0 0.0
    %427 = vmatprep.subr.mxu0 0.0
    %428 = vmatpush1.xpose.msra.mxu0 0.0
    %429 = vmatprep.subr.mxu0 0.0
    %430 = vmatpush1.xpose.msra.mxu0 0.0
    %431 = vmatprep.subr.mxu0 0.0
    %432 = vmatpush1.xpose.msra.mxu0 0.0
    %433 = vmatprep.subr.mxu0 0.0
    %434 = vmatpush1.xpose.msra.mxu0 0.0
    %435 = vmatprep.subr.mxu0 0.0
    %436 = vmatpush1.xpose.msra.mxu0 0.0
    %437 = vmatprep.subr.mxu0 0.0
    %438 = vmatpush1.xpose.msra.mxu0 0.0
    %439 = vmatprep.subr.mxu0 0.0
    %440 = vmatpush1.xpose.msra.mxu0 0.0
    %441 = vmatprep.subr.mxu0 0.0
    %442 = vmatpush1.xpose.msra.mxu0 0.0
    %443 = vmatprep.subr.mxu0 0.0
    %444 = vmatpush1.xpose.msra.mxu0 0.0
    %445 = vmatprep.subr.mxu0 0.0
    %446 = vmatpush1.xpose.msra.mxu0 0.0
    %447 = vmatprep.subr.mxu0 0.0
    %448 = vmatpush1.xpose.msra.mxu0 0.0
    %449 = vmatprep.mubr.f32.mxu0 0.0
    %450 = vmatmul.mubr.f32.gmra.mrb[0].mxu0 %v335
    %v451 = vpop.f32.mrb[0].mxu0
    %v452 = vadd.f32 0.0, %v451
    %v453 = vpop.f32.mrb[0].mxu0
    %454 = vdwg.mxu0
    %v455 = vmul.f32 %v452, 0.5
    %v457 = vsel %vm269, %v237, 0
    %v460 = vsel %vm269, %v238, 0
    %v463 = vsel %vm269, %v239, 0
    %v466 = vsel %vm269, %v240, 0
    %v469 = vsel %vm269, %v241, 0
    %v472 = vsel %vm269, %v242, 0
    %v475 = vsel %vm269, %v243, 0
    %v478 = vsel %vm269, %v244, 0
    %v481 = vsel %vm269, %v245, 0
    %v484 = vsel %vm269, %v246, 0
    %v487 = vsel %vm269, %v247, 0
    %v490 = vsel %vm269, %v248, 0
    %v493 = vsel %vm269, %v249, 0
    %v496 = vsel %vm269, %v250, 0
    %v499 = vsel %vm269, %v251, 0
    %v502 = vsel %vm269, %v252, 0
    %v505 = vsel %vm269, %v21, 0
    %v508 = vsel %vm269, %v22, 0
    %510 = vmatprep.subr.mxu0 0.0
    %511 = vmatpush1.xpose.msra.mxu0 %v505
    %512 = vmatprep.subr.mxu0 0.0
    %513 = vmatpush1.xpose.msra.mxu0 %v508
    %514 = vmatprep.subr.mxu0 0.0
    %515 = vmatpush1.xpose.msra.mxu0 0.0
    %516 = vmatprep.subr.mxu0 0.0
    %517 = vmatpush1.xpose.msra.mxu0 0.0
    %518 = vmatprep.subr.mxu0 0.0
    %519 = vmatpush1.xpose.msra.mxu0 0.0
    %520 = vmatprep.subr.mxu0 0.0
    %521 = vmatpush1.xpose.msra.mxu0 0.0
    %522 = vmatprep.subr.mxu0 0.0
    %523 = vmatpush1.xpose.msra.mxu0 0.0
    %524 = vmatprep.subr.mxu0 0.0
    %525 = vmatpush1.xpose.msra.mxu0 0.0
    %526 = vmatprep.subr.mxu0 0.0
    %527 = vmatpush1.xpose.msra.mxu0 0.0
    %528 = vmatprep.subr.mxu0 0.0
    %529 = vmatpush1.xpose.msra.mxu0 0.0
    %530 = vmatprep.subr.mxu0 0.0
    %531 = vmatpush1.xpose.msra.mxu0 0.0
    %532 = vmatprep.subr.mxu0 0.0
    %533 = vmatpush1.xpose.msra.mxu0 0.0
    %534 = vmatprep.subr.mxu0 0.0
    %535 = vmatpush1.xpose.msra.mxu0 0.0
    %536 = vmatprep.subr.mxu0 0.0
    %537 = vmatpush1.xpose.msra.mxu0 0.0
    %538 = vmatprep.subr.mxu0 0.0
    %539 = vmatpush1.xpose.msra.mxu0 0.0
    %540 = vmatprep.subr.mxu0 0.0
    %541 = vmatpush1.xpose.msra.mxu0 0.0
    %542 = vmatprep.subr.mxu0 0.0
    %543 = vmatpush1.xpose.msra.mxu0 0.0
    %544 = vmatprep.subr.mxu0 0.0
    %545 = vmatpush1.xpose.msra.mxu0 0.0
    %546 = vmatprep.subr.mxu0 0.0
    %547 = vmatpush1.xpose.msra.mxu0 0.0
    %548 = vmatprep.subr.mxu0 0.0
    %549 = vmatpush1.xpose.msra.mxu0 0.0
    %550 = vmatprep.subr.mxu0 0.0
    %551 = vmatpush1.xpose.msra.mxu0 0.0
    %552 = vmatprep.subr.mxu0 0.0
    %553 = vmatpush1.xpose.msra.mxu0 0.0
    %554 = vmatprep.subr.mxu0 0.0
    %555 = vmatpush1.xpose.msra.mxu0 0.0
    %556 = vmatprep.subr.mxu0 0.0
    %557 = vmatpush1.xpose.msra.mxu0 0.0
    %558 = vmatprep.subr.mxu0 0.0
    %559 = vmatpush1.xpose.msra.mxu0 0.0
    %560 = vmatprep.subr.mxu0 0.0
    %561 = vmatpush1.xpose.msra.mxu0 0.0
    %562 = vmatprep.subr.mxu0 0.0
    %563 = vmatpush1.xpose.msra.mxu0 0.0
    %564 = vmatprep.subr.mxu0 0.0
    %565 = vmatpush1.xpose.msra.mxu0 0.0
    %566 = vmatprep.subr.mxu0 0.0
    %567 = vmatpush1.xpose.msra.mxu0 0.0
    %568 = vmatprep.subr.mxu0 0.0
    %569 = vmatpush1.xpose.msra.mxu0 0.0
    %570 = vmatprep.subr.mxu0 0.0
    %571 = vmatpush1.xpose.msra.mxu0 0.0
    %572 = vmatprep.subr.mxu0 0.0
    %573 = vmatpush1.xpose.msra.mxu0 0.0
    %574 = vmatprep.mubr.f32.mxu0 0.0
    %575 = vmatmul.mubr.f32.gmra.mrb[0].mxu0 %v457
    %v576 = vpop.f32.mrb[0].mxu0
    %v577 = vadd.f32 0.0, %v576
    %v578 = vpop.f32.mrb[0].mxu0
    %579 = vmatprep.mubr.f32.mxu0 0.0
    %580 = vmatmul.mubr.f32.gmra.mrb[0].mxu0 %v460
    %v581 = vpop.f32.mrb[0].mxu0
    %v582 = vadd.f32 0.0, %v581
    %v583 = vpop.f32.mrb[0].mxu0
    %584 = vmatprep.mubr.f32.mxu0 0.0
    %585 = vmatmul.mubr.f32.gmra.mrb[0].mxu0 %v463
    %v586 = vpop.f32.mrb[0].mxu0
    %v587 = vadd.f32 0.0, %v586
    %v588 = vpop.f32.mrb[0].mxu0
    %589 = vmatprep.mubr.f32.mxu0 0.0
    %590 = vmatmul.mubr.f32.gmra.mrb[0].mxu0 %v466
    %v591 = vpop.f32.mrb[0].mxu0
    %v592 = vadd.f32 0.0, %v591
    %v593 = vpop.f32.mrb[0].mxu0
    %594 = vmatprep.mubr.f32.mxu0 0.0
    %595 = vmatmul.mubr.f32.gmra.mrb[0].mxu0 %v469
    %v596 = vpop.f32.mrb[0].mxu0
    %v597 = vadd.f32 0.0, %v596
    %v598 = vpop.f32.mrb[0].mxu0
    %599 = vmatprep.mubr.f32.mxu0 0.0
    %600 = vmatmul.mubr.f32.gmra.mrb[0].mxu0 %v472
    %v601 = vpop.f32.mrb[0].mxu0
    %v602 = vadd.f32 0.0, %v601
    %v603 = vpop.f32.mrb[0].mxu0
    %604 = vmatprep.mubr.f32.mxu0 0.0
    %605 = vmatmul.mubr.f32.gmra.mrb[0].mxu0 %v475
    %v606 = vpop.f32.mrb[0].mxu0
    %v607 = vadd.f32 0.0, %v606
    %v608 = vpop.f32.mrb[0].mxu0
    %609 = vmatprep.mubr.f32.mxu0 0.0
    %610 = vmatmul.mubr.f32.gmra.mrb[0].mxu0 %v478
    %v611 = vpop.f32.mrb[0].mxu0
    %v612 = vadd.f32 0.0, %v611
    %v613 = vpop.f32.mrb[0].mxu0
    %614 = vmatprep.mubr.f32.mxu0 0.0
    %615 = vmatmul.mubr.f32.gmra.mrb[0].mxu0 %v481
    %v616 = vpop.f32.mrb[0].mxu0
    %v617 = vadd.f32 0.0, %v616
    %v618 = vpop.f32.mrb[0].mxu0
    %619 = vmatprep.mubr.f32.mxu0 0.0
    %620 = vmatmul.mubr.f32.gmra.mrb[0].mxu0 %v484
    %v621 = vpop.f32.mrb[0].mxu0
    %v622 = vadd.f32 0.0, %v621
    %v623 = vpop.f32.mrb[0].mxu0
    %624 = vmatprep.mubr.f32.mxu0 0.0
    %625 = vmatmul.mubr.f32.gmra.mrb[0].mxu0 %v487
    %v626 = vpop.f32.mrb[0].mxu0
    %v627 = vadd.f32 0.0, %v626
    %v628 = vpop.f32.mrb[0].mxu0
    %629 = vmatprep.mubr.f32.mxu0 0.0
    %630 = vmatmul.mubr.f32.gmra.mrb[0].mxu0 %v490
    %v631 = vpop.f32.mrb[0].mxu0
    %v632 = vadd.f32 0.0, %v631
    %v633 = vpop.f32.mrb[0].mxu0
    %634 = vmatprep.mubr.f32.mxu0 0.0
    %635 = vmatmul.mubr.f32.gmra.mrb[0].mxu0 %v493
    %v636 = vpop.f32.mrb[0].mxu0
    %v637 = vadd.f32 0.0, %v636
    %v638 = vpop.f32.mrb[0].mxu0
    %639 = vmatprep.mubr.f32.mxu0 0.0
    %640 = vmatmul.mubr.f32.gmra.mrb[0].mxu0 %v496
    %v641 = vpop.f32.mrb[0].mxu0
    %v642 = vadd.f32 0.0, %v641
    %v643 = vpop.f32.mrb[0].mxu0
    %644 = vmatprep.mubr.f32.mxu0 0.0
    %645 = vmatmul.mubr.f32.gmra.mrb[0].mxu0 %v499
    %v646 = vpop.f32.mrb[0].mxu0
    %v647 = vadd.f32 0.0, %v646
    %v648 = vpop.f32.mrb[0].mxu0
    %649 = vmatprep.mubr.f32.mxu0 0.0
    %650 = vmatmul.mubr.f32.gmra.mrb[0].mxu0 %v502
    %v651 = vpop.f32.mrb[0].mxu0
    %v652 = vadd.f32 0.0, %v651
    %v653 = vpop.f32.mrb[0].mxu0
    %654 = vdwg.mxu0
    %v655 = vsub.f32 %v577, %v318
    %v656 = vsub.f32 %v582, %v319
    %v657 = vsub.f32 %v587, %v320
    %v658 = vsub.f32 %v592, %v321
    %v659 = vsub.f32 %v597, %v322
    %v660 = vsub.f32 %v602, %v323
    %v661 = vsub.f32 %v607, %v324
    %v662 = vsub.f32 %v612, %v325
    %v663 = vsub.f32 %v617, %v326
    %v664 = vsub.f32 %v622, %v327
    %v665 = vsub.f32 %v627, %v328
    %v666 = vsub.f32 %v632, %v329
    %v667 = vsub.f32 %v637, %v330
    %v668 = vsub.f32 %v642, %v331
    %v669 = vsub.f32 %v647, %v332
    %v670 = vsub.f32 %v652, %v333
    %v672 = vlaneseq
    %v673 = vshrl.u32 %v672, 7
    %v674 = vsub.s32 0, %v673
    %v675 = vrot.slane %v23, %v674
    %v677 = vsub.f32 %v655, %v675
    %v678 = vsub.f32 %v656, %v675
    %v679 = vsub.f32 %v657, %v675
    %v680 = vsub.f32 %v658, %v675
    %v681 = vsub.f32 %v659, %v675
    %v682 = vsub.f32 %v660, %v675
    %v683 = vsub.f32 %v661, %v675
    %v684 = vsub.f32 %v662, %v675
    %v685 = vsub.f32 %v663, %v675
    %v686 = vsub.f32 %v664, %v675
    %v687 = vsub.f32 %v665, %v675
    %v688 = vsub.f32 %v666, %v675
    %v689 = vsub.f32 %v667, %v675
    %v690 = vsub.f32 %v668, %v675
    %v691 = vsub.f32 %v669, %v675
    %v692 = vsub.f32 %v670, %v675
    %v693 = vmin.f32 %v677, 0.0
    %v694 = vmin.f32 %v678, 0.0
    %v695 = vmin.f32 %v679, 0.0
    %v696 = vmin.f32 %v680, 0.0
    %v697 = vmin.f32 %v681, 0.0
    %v698 = vmin.f32 %v682, 0.0
    %v699 = vmin.f32 %v683, 0.0
    %v700 = vmin.f32 %v684, 0.0
    %v701 = vmin.f32 %v685, 0.0
    %v702 = vmin.f32 %v686, 0.0
    %v703 = vmin.f32 %v687, 0.0
    %v704 = vmin.f32 %v688, 0.0
    %v705 = vmin.f32 %v689, 0.0
    %v706 = vmin.f32 %v690, 0.0
    %v707 = vmin.f32 %v691, 0.0
    %v708 = vmin.f32 %v692, 0.0
    %v709 = vmul.f32 %v693, 1.442695
    %v710 = vpow.pop %v709
    %v711 = vmul.f32 %v694, 1.442695
    %v712 = vpow.pop %v711
    %v713 = vmul.f32 %v695, 1.442695
    %v714 = vpow.pop %v713
    %v715 = vmul.f32 %v696, 1.442695
    %v716 = vpow.pop %v715
    %v717 = vmul.f32 %v697, 1.442695
    %v718 = vpow.pop %v717
    %v719 = vmul.f32 %v698, 1.442695
    %v720 = vpow.pop %v719
    %v721 = vmul.f32 %v699, 1.442695
    %v722 = vpow.pop %v721
    %v723 = vmul.f32 %v700, 1.442695
    %v724 = vpow.pop %v723
    %v725 = vmul.f32 %v701, 1.442695
    %v726 = vpow.pop %v725
    %v727 = vmul.f32 %v702, 1.442695
    %v728 = vpow.pop %v727
    %v729 = vmul.f32 %v703, 1.442695
    %v730 = vpow.pop %v729
    %v731 = vmul.f32 %v704, 1.442695
    %v732 = vpow.pop %v731
    %v733 = vmul.f32 %v705, 1.442695
    %v734 = vpow.pop %v733
    %v735 = vmul.f32 %v706, 1.442695
    %v736 = vpow.pop %v735
    %v737 = vmul.f32 %v707, 1.442695
    %v738 = vpow.pop %v737
    %v739 = vmul.f32 %v708, 1.442695
    %v740 = vpow.pop %v739
    %v742 = vsel %vm269, %v233, 0
    %v745 = vsel %vm269, %v234, 0
    %747 = vmatprep.subr.mxu0 0.0
    %748 = vmatpush1.xpose.msra.mxu0 %v457
    %749 = vmatprep.subr.mxu0 0.0
    %750 = vmatpush1.xpose.msra.mxu0 %v460
    %751 = vmatprep.subr.mxu0 0.0
    %752 = vmatpush1.xpose.msra.mxu0 %v463
    %753 = vmatprep.subr.mxu0 0.0
    %754 = vmatpush1.xpose.msra.mxu0 %v466
    %755 = vmatprep.subr.mxu0 0.0
    %756 = vmatpush1.xpose.msra.mxu0 %v469
    %757 = vmatprep.subr.mxu0 0.0
    %758 = vmatpush1.xpose.msra.mxu0 %v472
    %759 = vmatprep.subr.mxu0 0.0
    %760 = vmatpush1.xpose.msra.mxu0 %v475
    %761 = vmatprep.subr.mxu0 0.0
    %762 = vmatpush1.xpose.msra.mxu0 %v478
    %763 = vmatprep.subr.mxu0 0.0
    %764 = vmatpush1.xpose.msra.mxu0 %v481
    %765 = vmatprep.subr.mxu0 0.0
    %766 = vmatpush1.xpose.msra.mxu0 %v484
    %767 = vmatprep.subr.mxu0 0.0
    %768 = vmatpush1.xpose.msra.mxu0 %v487
    %769 = vmatprep.subr.mxu0 0.0
    %770 = vmatpush1.xpose.msra.mxu0 %v490
    %771 = vmatprep.subr.mxu0 0.0
    %772 = vmatpush1.xpose.msra.mxu0 %v493
    %773 = vmatprep.subr.mxu0 0.0
    %774 = vmatpush1.xpose.msra.mxu0 %v496
    %775 = vmatprep.subr.mxu0 0.0
    %776 = vmatpush1.xpose.msra.mxu0 %v499
    %777 = vmatprep.subr.mxu0 0.0
    %778 = vmatpush1.xpose.msra.mxu0 %v502
    %779 = vmatprep.subr.mxu0 0.0
    %780 = vmatpush1.xpose.msra.mxu0 0.0
    %781 = vmatprep.subr.mxu0 0.0
    %782 = vmatpush1.xpose.msra.mxu0 0.0
    %783 = vmatprep.subr.mxu0 0.0
    %784 = vmatpush1.xpose.msra.mxu0 0.0
    %785 = vmatprep.subr.mxu0 0.0
    %786 = vmatpush1.xpose.msra.mxu0 0.0
    %787 = vmatprep.subr.mxu0 0.0
    %788 = vmatpush1.xpose.msra.mxu0 0.0
    %789 = vmatprep.subr.mxu0 0.0
    %790 = vmatpush1.xpose.msra.mxu0 0.0
    %791 = vmatprep.subr.mxu0 0.0
    %792 = vmatpush1.xpose.msra.mxu0 0.0
    %793 = vmatprep.subr.mxu0 0.0
    %794 = vmatpush1.xpose.msra.mxu0 0.0
    %795 = vmatprep.subr.mxu0 0.0
    %796 = vmatpush1.xpose.msra.mxu0 0.0
    %797 = vmatprep.subr.mxu0 0.0
    %798 = vmatpush1.xpose.msra.mxu0 0.0
    %799 = vmatprep.subr.mxu0 0.0
    %800 = vmatpush1.xpose.msra.mxu0 0.0
    %801 = vmatprep.subr.mxu0 0.0
    %802 = vmatpush1.xpose.msra.mxu0 0.0
    %803 = vmatprep.subr.mxu0 0.0
    %804 = vmatpush1.xpose.msra.mxu0 0.0
    %805 = vmatprep.subr.mxu0 0.0
    %806 = vmatpush1.xpose.msra.mxu0 0.0
    %807 = vmatprep.subr.mxu0 0.0
    %808 = vmatpush1.xpose.msra.mxu0 0.0
    %809 = vmatprep.subr.mxu0 0.0
    %810 = vmatpush1.xpose.msra.mxu0 0.0
    %811 = vmatprep.mubr.f32.mxu0 0.0
    %812 = vmatmul.mubr.f32.gmra.mrb[0].mxu0 %v742
    %v813 = vpop.f32.mrb[0].mxu0
    %v814 = vadd.f32 0.0, %v813
    %v815 = vpop.f32.mrb[0].mxu0
    %816 = vmatprep.mubr.f32.mxu0 0.0
    %817 = vmatmul.mubr.f32.gmra.mrb[0].mxu0 %v745
    %v818 = vpop.f32.mrb[0].mxu0
    %v819 = vadd.f32 0.0, %v818
    %v820 = vpop.f32.mrb[0].mxu0
    %821 = vdwg.mxu0
    %823 = vset.pattern.permute.xlu0 0
    %824 = vperm.xlu0 %823, %v235
    %v825 = vpop.permute.xlu0 %824
    %828 = vset.pattern.permute.xlu0 0
    %829 = vperm.xlu0 %828, %v236
    %v830 = vpop.permute.xlu0 %829
    %v832 = vsub.f32 %v814, %v825
    %v833 = vsub.f32 %v819, %v830
    %v834 = vlaneseq
    %v835 = vshrl.u32 %v834, 7
    %v836 = vsub.s32 0, %v835
    %v837 = vrot.slane %v455, %v836
    %v838 = vsub.f32 %v832, %v837
    %v839 = vsub.f32 %v833, %v837
    %v840 = vmin.f32 %v838, 0.0
    %v841 = vmin.f32 %v839, 0.0
    %v842 = vmul.f32 %v840, 1.442695
    %v843 = vpow.pop %v842
    %v844 = vmul.f32 %v841, 1.442695
    %v845 = vpow.pop %v844
    %v846 = vld [vmem:[#allocation2] sm:$0xff]
    %v847 = vld [vmem:[#allocation2 + $0x8] sm:$0xff]
    %vm848 = vcmask 130048
    %v850 = vsel %vm848, %v846, 0
    %v853 = vsel %vm848, %v847, 0
    %v856 = vsel %vm848, %v710, 0
    %v859 = vsel %vm848, %v712, 0
    %v862 = vsel %vm848, %v714, 0
    %v865 = vsel %vm848, %v716, 0
    %v868 = vsel %vm848, %v718, 0
    %v871 = vsel %vm848, %v720, 0
    %v874 = vsel %vm848, %v722, 0
    %v877 = vsel %vm848, %v724, 0
    %v880 = vsel %vm848, %v726, 0
    %v883 = vsel %vm848, %v728, 0
    %v886 = vsel %vm848, %v730, 0
    %v889 = vsel %vm848, %v732, 0
    %v892 = vsel %vm848, %v734, 0
    %v895 = vsel %vm848, %v736, 0
    %v898 = vsel %vm848, %v738, 0
    %v901 = vsel %vm848, %v740, 0
    %903 = vmatprep.subr.mxu0 0.0
    %904 = vmatpush1.xpose.msra.mxu0 %v856
    %905 = vmatprep.subr.mxu0 0.0
    %906 = vmatpush1.xpose.msra.mxu0 %v859
    %907 = vmatprep.subr.mxu0 0.0
    %908 = vmatpush1.xpose.msra.mxu0 %v862
    %909 = vmatprep.subr.mxu0 0.0
    %910 = vmatpush1.xpose.msra.mxu0 %v865
    %911 = vmatprep.subr.mxu0 0.0
    %912 = vmatpush1.xpose.msra.mxu0 %v868
    %913 = vmatprep.subr.mxu0 0.0
    %914 = vmatpush1.xpose.msra.mxu0 %v871
    %915 = vmatprep.subr.mxu0 0.0
    %916 = vmatpush1.xpose.msra.mxu0 %v874
    %917 = vmatprep.subr.mxu0 0.0
    %918 = vmatpush1.xpose.msra.mxu0 %v877
    %919 = vmatprep.subr.mxu0 0.0
    %920 = vmatpush1.xpose.msra.mxu0 %v880
    %921 = vmatprep.subr.mxu0 0.0
    %922 = vmatpush1.xpose.msra.mxu0 %v883
    %923 = vmatprep.subr.mxu0 0.0
    %924 = vmatpush1.xpose.msra.mxu0 %v886
    %925 = vmatprep.subr.mxu0 0.0
    %926 = vmatpush1.xpose.msra.mxu0 %v889
    %927 = vmatprep.subr.mxu0 0.0
    %928 = vmatpush1.xpose.msra.mxu0 %v892
    %929 = vmatprep.subr.mxu0 0.0
    %930 = vmatpush1.xpose.msra.mxu0 %v895
    %931 = vmatprep.subr.mxu0 0.0
    %932 = vmatpush1.xpose.msra.mxu0 %v898
    %933 = vmatprep.subr.mxu0 0.0
    %934 = vmatpush1.xpose.msra.mxu0 %v901
    %935 = vmatprep.subr.mxu0 0.0
    %936 = vmatpush1.xpose.msra.mxu0 0.0
    %937 = vmatprep.subr.mxu0 0.0
    %938 = vmatpush1.xpose.msra.mxu0 0.0
    %939 = vmatprep.subr.mxu0 0.0
    %940 = vmatpush1.xpose.msra.mxu0 0.0
    %941 = vmatprep.subr.mxu0 0.0
    %942 = vmatpush1.xpose.msra.mxu0 0.0
    %943 = vmatprep.subr.mxu0 0.0
    %944 = vmatpush1.xpose.msra.mxu0 0.0
    %945 = vmatprep.subr.mxu0 0.0
    %946 = vmatpush1.xpose.msra.mxu0 0.0
    %947 = vmatprep.subr.mxu0 0.0
    %948 = vmatpush1.xpose.msra.mxu0 0.0
    %949 = vmatprep.subr.mxu0 0.0
    %950 = vmatpush1.xpose.msra.mxu0 0.0
    %951 = vmatprep.subr.mxu0 0.0
    %952 = vmatpush1.xpose.msra.mxu0 0.0
    %953 = vmatprep.subr.mxu0 0.0
    %954 = vmatpush1.xpose.msra.mxu0 0.0
    %955 = vmatprep.subr.mxu0 0.0
    %956 = vmatpush1.xpose.msra.mxu0 0.0
    %957 = vmatprep.subr.mxu0 0.0
    %958 = vmatpush1.xpose.msra.mxu0 0.0
    %959 = vmatprep.subr.mxu0 0.0
    %960 = vmatpush1.xpose.msra.mxu0 0.0
    %961 = vmatprep.subr.mxu0 0.0
    %962 = vmatpush1.xpose.msra.mxu0 0.0
    %963 = vmatprep.subr.mxu0 0.0
    %964 = vmatpush1.xpose.msra.mxu0 0.0
    %965 = vmatprep.subr.mxu0 0.0
    %966 = vmatpush1.xpose.msra.mxu0 0.0
    %967 = vmatprep.mubr.f32.mxu0 0.0
    %968 = vmatmul.mubr.f32.gmra.mrb[0].mxu0 %v850
    %v969 = vpop.f32.mrb[0].mxu0
    %v970 = vadd.f32 0.0, %v969
    %v971 = vpop.f32.mrb[0].mxu0
    %972 = vmatprep.mubr.f32.mxu0 0.0
    %973 = vmatmul.mubr.f32.gmra.mrb[0].mxu0 %v853
    %v974 = vpop.f32.mrb[0].mxu0
    %v975 = vadd.f32 0.0, %v974
    %v976 = vpop.f32.mrb[0].mxu0
    %977 = vdwg.mxu0
    %v978 = vadd.f32 %v843, %v970
    %v979 = vadd.f32 %v845, %v975
    %980 = vst [vmem:[#allocation4] sm:$0xff] %v978
    %981 = vst [vmem:[#allocation4 + $0x8] sm:$0xff] %v979
    // Predicated region
    $region26: #{tpu_custom_call.1} parent=1 // pred_check
      _
    $region27: #{tpu_custom_call.1} parent=1 // pred_check_branch
      %983 = sbr.rel (0) target = $region29
    $region28: #{tpu_custom_call.1} parent=1 // pred_region
      %s985 = ssub.s32 256, 256
      %986 = vsyncadd [#allocation5], %s985
      %s987 = sshll.u32 [#allocation4], 4
      %s988 = int_to_ptr.vmem [resolvable:$true] %s987
      %993 = dma.vmem_to_hbm [thread:$0]  %s988, 256, %s5, [#allocation5], 128, 128, 8
    $region29: #{tpu_custom_call.1} parent=1 // pred_fallthru
      _
    // Predicated region
    $region30: #{tpu_custom_call.1} parent=1 // pred_check
      _
    $region31: #{tpu_custom_call.1} parent=1 // pred_check_branch
      %995 = sbr.rel (0) target = $region33
    $region32: #{tpu_custom_call.1} parent=1 // pred_region
      %996 = dma.done [#allocation5], 256
    $region33: #{tpu_custom_call.1} parent=1 // pred_fallthru
      _
    %997 = vsyncpa [#allocation5], 1

</llo_original>
